<compile_context>
chip_gen: v7x
topology: tpu7x:2x2x1
jax: 0.10.0
libtpu: 0.0.40
codegen_flags: <defaults>
</compile_context>

<pallas_src>
import functools

import jax
import jax.numpy as jnp
from jax.experimental import pallas as pl
from jax.experimental.pallas import tpu as pltpu

LANE = 128
SUBLANE = 8
MAX_TM = 1024          # rows per tile in the multi-block path (512 KiB / f32 stream)
FUSED_MAX_ROWS = 1024  # up to this many 128-lane rows -> single fused kernel
PAD_X = -100.0         # pad fill for logits: loss/focal are (effectively) 0 there


def _round_up(a, b):
    return (a + b - 1) // b * b


def _static_pow(x, gamma):
    """x ** gamma; exact repeated multiplies for small non-negative integer gamma."""
    g = float(gamma)
    if g.is_integer() and 0 <= g <= 16:
        gi = int(g)
        if gi == 0:
            return jnp.ones_like(x)
        result = None
        base = x
        while gi:
            if gi & 1:
                result = base if result is None else result * base
            gi >>= 1
            if gi:
                base = base * base
        return result
    return x ** g


def _focal_terms(x, t, alpha, gamma):
    """Per-element BCE loss and unscaled focal loss (single shared exp)."""
    e = jnp.exp(-jnp.abs(x))                                # shared transcendental
    loss = jnp.maximum(x, 0.0) - x * t + jnp.log1p(e)       # stable BCE-with-logits
    # 1 - sigmoid(x) = sigmoid(-x) = where(x >= 0, e, 1) / (1 + e)
    one_minus_p = jnp.where(x >= 0.0, e, 1.0) / (1.0 + e)
    class_w = jnp.where(t == 1.0, 1.0 - alpha, alpha)
    focal = class_w * _static_pow(one_minus_p, gamma) * loss
    return loss, focal


def _focal_fused_kernel(x_ref, t_ref, out_ref, *, alpha, gamma):
    """Small-tensor path: focal loss + in-kernel reduction + scaling, one launch."""
    x = x_ref[...].astype(jnp.float32)
    t = t_ref[...].astype(jnp.float32)
    loss, focal = _focal_terms(x, t, alpha, gamma)
    # Matches PyTorch: no zero-denominator guard (inf/NaN if focal.sum() == 0).
    scale = jnp.sum(loss) / jnp.sum(focal)
    out_ref[...] = (focal * scale).astype(out_ref.dtype)


def _focal_part_kernel(x_ref, t_ref, focal_ref, lpart_ref, fpart_ref, *,
                       alpha, gamma, tm, rows_valid, needs_row_mask):
    """Pass 1 (multi-block): unscaled focal loss + lane-dense per-block partial sums."""
    x = x_ref[...].astype(jnp.float32)
    t = t_ref[...].astype(jnp.float32)
    loss, focal = _focal_terms(x, t, alpha, gamma)

    if needs_row_mask:
        # Only generated when the row count is not a multiple of tm: mask both terms
        # so garbage rows of the ragged last block cannot pollute the partial sums.
        row = jax.lax.broadcasted_iota(jnp.int32, x.shape, 0) + pl.program_id(0) * tm
        valid = row < rows_valid
        loss = jnp.where(valid, loss, 0.0)
        focal = jnp.where(valid, focal, 0.0)

    focal_ref[...] = focal
    # Per-block partial sums, reduced over the sublane axis only (lane-dense write).
    lpart_ref[...] = jnp.sum(loss, axis=0).reshape(1, 1, LANE)
    fpart_ref[...] = jnp.sum(focal, axis=0).reshape(1, 1, LANE)


@functools.partial(jax.jit, static_argnames=("alpha", "gamma"))
def focal_loss_pallas(inputs, targets, *, alpha=0.2, gamma=2):
    orig_shape = inputs.shape
    orig_dtype = inputs.dtype
    n = int(inputs.size)  # static under jit
    alpha = float(alpha)

    x = inputs.reshape(-1)   # native dtype: no wrapper upcast
    t = targets.reshape(-1)

    rows = pl.cdiv(n, LANE)

    # ---------------- small path: one fused kernel ----------------
    if rows <= FUSED_MAX_ROWS:
        n_pad = rows * LANE
        if n_pad != n:
            x = jnp.pad(x, (0, n_pad - n), constant_values=PAD_X)
            t = jnp.pad(t, (0, n_pad - n))
        out = pl.pallas_call(
            functools.partial(_focal_fused_kernel, alpha=alpha, gamma=gamma),
            out_shape=jax.ShapeDtypeStruct((rows, LANE), orig_dtype),
        )(x.reshape(rows, LANE), t.reshape(rows, LANE))
        return out.reshape(-1)[:n].reshape(orig_shape)

    # ------------- large path: parallel pass 1 + fused XLA epilogue -------------
    # Keep at least two blocks so the "parallel" axis can use both v7x TensorCores.
    tm = min(MAX_TM, _round_up(pl.cdiv(rows, 2), SUBLANE))

    if n != rows * LANE:
        # Lane-ragged: the 2-D reshape needs a pad copy anyway, so pad all the way to
        # a multiple of tm with neutral fill values -> no in-kernel mask at all.
        rows_arr = _round_up(rows, tm)
        pad = rows_arr * LANE - n
        x = jnp.pad(x, (0, pad), constant_values=PAD_X)
        t = jnp.pad(t, (0, pad))
        needs_row_mask = False
    else:
        # Lane-aligned: skip the pad copy; mask the (possibly) ragged last block only.
        rows_arr = rows
        needs_row_mask = (rows % tm != 0)

    x2 = x.reshape(rows_arr, LANE)
    t2 = t.reshape(rows_arr, LANE)
    grid_n = pl.cdiv(rows_arr, tm)

    tile_spec = pl.BlockSpec((tm, LANE), lambda i: (i, 0))
    part_spec = pl.BlockSpec((1, 1, LANE), lambda i: (i, 0, 0))

    kernel1 = functools.partial(
        _focal_part_kernel, alpha=alpha, gamma=gamma, tm=tm,
        rows_valid=rows, needs_row_mask=needs_row_mask)

    focal_unscaled, loss_parts, focal_parts = pl.pallas_call(
        kernel1,
        out_shape=(
            jax.ShapeDtypeStruct((rows_arr, LANE), jnp.float32),
            jax.ShapeDtypeStruct((grid_n, 1, LANE), jnp.float32),
            jax.ShapeDtypeStruct((grid_n, 1, LANE), jnp.float32),
        ),
        grid_spec=pltpu.PrefetchScalarGridSpec(
            num_scalar_prefetch=0,
            grid=(grid_n,),
            in_specs=[tile_spec, tile_spec],
            out_specs=(tile_spec, part_spec, part_spec),
        ),
        compiler_params=pltpu.CompilerParams(
            dimension_semantics=("parallel",)),
    )(x2, t2)

    # Tiny cross-block reduce (grid_n * 128 elems) + scale; the multiply, slice,
    # reshape and dtype cast all fuse into one XLA elementwise pass.
    scale = jnp.sum(loss_parts) / jnp.sum(focal_parts)
    out = (focal_unscaled * scale).reshape(-1)[:n]
    return out.reshape(orig_shape).astype(orig_dtype)


def focal_loss_ref(inputs, targets, alpha=0.2, gamma=2):
    """Pure-JAX reference mirroring the PyTorch module (for correctness check)."""
    x = inputs.astype(jnp.float32)
    t = targets.astype(jnp.float32)
    loss = jnp.maximum(x, 0.0) - x * t + jnp.log1p(jnp.exp(-jnp.abs(x)))
    cw = jnp.where(t == 1.0, 1.0 - alpha, alpha)
    focal = cw * (1.0 - jax.nn.sigmoid(x)) ** gamma * loss
    return focal * (loss.sum() / focal.sum())


if __name__ == "__main__":
    key = jax.random.PRNGKey(0)
    k1, k2, k3, k4, k5, k6 = jax.random.split(key, 6)

    # 1) NCHW segmentation-style logits, n % 128 == 0 -> fused single-kernel path.
    inputs = jax.random.normal(k1, (2, 4, 16, 16), dtype=jnp.float32)
    targets = (jax.random.uniform(k2, (2, 4, 16, 16)) > 0.5).astype(jnp.float32)
    out = jax.block_until_ready(focal_loss_pallas(inputs, targets, alpha=0.2, gamma=2))
    ref = focal_loss_ref(inputs, targets, alpha=0.2, gamma=2)
    assert out.shape == inputs.shape and out.dtype == inputs.dtype
    assert jnp.allclose(out, ref, atol=1e-5, rtol=2e-5)

    # 2) Ragged size (n % 128 != 0) -> fused path with neutral-fill padding.
    inputs_r = jax.random.normal(k3, (2, 3, 7, 5), dtype=jnp.float32)
    targets_r = (jax.random.uniform(k4, (2, 3, 7, 5)) > 0.5).astype(jnp.float32)
    out_r = jax.block_until_ready(
        focal_loss_pallas(inputs_r, targets_r, alpha=0.2, gamma=2))
    ref_r = focal_loss_ref(inputs_r, targets_r, alpha=0.2, gamma=2)
    assert out_r.shape == inputs_r.shape
    assert jnp.allclose(out_r, ref_r, atol=1e-5, rtol=2e-5)

    # 3) Larger lane-aligned, tile-ragged size -> multi-block path (grid_n == 2,
    #    last-block row mask, no pad copy).
    inputs_b = jax.random.normal(k5, (2, 5, 128, 130), dtype=jnp.float32)
    targets_b = (jax.random.uniform(k6, (2, 5, 128, 130)) > 0.5).astype(jnp.float32)
    out_b = jax.block_until_ready(
        focal_loss_pallas(inputs_b, targets_b, alpha=0.2, gamma=2))
    ref_b = focal_loss_ref(inputs_b, targets_b, alpha=0.2, gamma=2)
    assert out_b.shape == inputs_b.shape
    assert jnp.allclose(out_b, ref_b, atol=1e-5, rtol=1e-4)

    print("KERNEL_OK")
</pallas_src>

<mosaic_0001>
module attributes {stable_mosaic.version = 11 : i64} {
  func.func @_focal_fused_kernel(%arg0: memref<16x128xf32, #tpu.memory_space<vmem>>, %arg1: memref<16x128xf32, #tpu.memory_space<vmem>>, %arg2: memref<16x128xf32, #tpu.memory_space<vmem>>) attributes {dimension_semantics = [], scalar_prefetch = 0 : i64, scratch_operands = 0 : i64, tpu.core_type = #tpu.core_type<tc>} {
    %c0 = arith.constant 0 : index
    %c0_0 = arith.constant 0 : index
    %0 = vector.load %arg0[%c0, %c0_0] : memref<16x128xf32, #tpu.memory_space<vmem>>, vector<16x128xf32>
    %c0_1 = arith.constant 0 : index
    %c0_2 = arith.constant 0 : index
    %1 = vector.load %arg1[%c0_1, %c0_2] : memref<16x128xf32, #tpu.memory_space<vmem>>, vector<16x128xf32>
    %2 = math.absf %0 : vector<16x128xf32>
    %cst = arith.constant 0.000000e+00 : f32
    %3 = vector.broadcast %cst : f32 to vector<16x128xf32>
    %4 = arith.subf %3, %2 : vector<16x128xf32>
    %5 = math.exp %4 : vector<16x128xf32>
    %cst_3 = arith.constant 0.000000e+00 : f32
    %6 = vector.broadcast %cst_3 : f32 to vector<16x128xf32>
    %7 = arith.maximumf %0, %6 : vector<16x128xf32>
    %8 = arith.mulf %0, %1 : vector<16x128xf32>
    %9 = arith.subf %7, %8 : vector<16x128xf32>
    %10 = math.log1p %5 : vector<16x128xf32>
    %11 = arith.addf %9, %10 : vector<16x128xf32>
    %cst_4 = arith.constant 0.000000e+00 : f32
    %12 = vector.broadcast %cst_4 : f32 to vector<16x128xf32>
    %13 = arith.cmpf oge, %0, %12 : vector<16x128xf32>
    %cst_5 = arith.constant 1.000000e+00 : f32
    %14 = vector.broadcast %cst_5 : f32 to vector<16x128xf32>
    %15 = arith.select %13, %5, %14 : vector<16x128xi1>, vector<16x128xf32>
    %cst_6 = arith.constant 1.000000e+00 : f32
    %16 = vector.broadcast %cst_6 : f32 to vector<16x128xf32>
    %17 = arith.addf %16, %5 : vector<16x128xf32>
    %18 = arith.divf %15, %17 : vector<16x128xf32>
    %cst_7 = arith.constant 1.000000e+00 : f32
    %19 = vector.broadcast %cst_7 : f32 to vector<16x128xf32>
    %20 = arith.cmpf oeq, %1, %19 : vector<16x128xf32>
    %cst_8 = arith.constant 8.000000e-01 : f32
    %cst_9 = arith.constant 2.000000e-01 : f32
    %21 = vector.broadcast %cst_8 : f32 to vector<16x128xf32>
    %22 = vector.broadcast %cst_9 : f32 to vector<16x128xf32>
    %23 = arith.select %20, %21, %22 : vector<16x128xi1>, vector<16x128xf32>
    %24 = arith.mulf %18, %18 : vector<16x128xf32>
    %25 = arith.mulf %23, %24 : vector<16x128xf32>
    %26 = arith.mulf %25, %11 : vector<16x128xf32>
    %27 = vector.shape_cast %11 : vector<16x128xf32> to vector<1x16x128xf32>
    %cst_10 = arith.constant dense<0.000000e+00> : vector<1xf32>
    %28 = vector.multi_reduction <add>, %27, %cst_10 [1, 2] : vector<1x16x128xf32> to vector<1xf32>
    %29 = vector.shape_cast %28 : vector<1xf32> to vector<1x1x1xf32>
    %30 = vector.extract %29[0, 0, 0] : f32 from vector<1x1x1xf32>
    %31 = vector.shape_cast %26 : vector<16x128xf32> to vector<1x16x128xf32>
    %cst_11 = arith.constant dense<0.000000e+00> : vector<1xf32>
    %32 = vector.multi_reduction <add>, %31, %cst_11 [1, 2] : vector<1x16x128xf32> to vector<1xf32>
    %33 = vector.shape_cast %32 : vector<1xf32> to vector<1x1x1xf32>
    %34 = vector.extract %33[0, 0, 0] : f32 from vector<1x1x1xf32>
    %35 = arith.divf %30, %34 : f32
    %36 = vector.broadcast %35 : f32 to vector<16x128xf32>
    %37 = arith.mulf %26, %36 : vector<16x128xf32>
    %c0_12 = arith.constant 0 : index
    %c0_13 = arith.constant 0 : index
    %38 = vector.load %arg2[%c0_12, %c0_13] : memref<16x128xf32, #tpu.memory_space<vmem>>, vector<16x128xf32>
    tpu.vector_store %arg2[%c0_12, %c0_13], %37 {strides = array<i32>} : memref<16x128xf32, #tpu.memory_space<vmem>>, vector<16x128xf32>,
    return
  }
}

</mosaic_0001>

<llo_original>
// kernel: focal_loss_pallas.1
$region0: #{focal_loss_pallas.1}
  #allocation0 [shape = 'u32[]', space=smem, size = 0x4, offset = 0x4, fixed_abs, tag = 'smem constant byte address 0x4 - core index']
  #allocation1 [shape = 'u32[144,128]{1,0:T(1,128)}', space=vmem, size = 0x12000, scoped, tag = 'internal scratch']
  %s0 = inlined_call_operand.vmem [shape: f32[16,128], index: 0, kind: input, shape index: {}]
  %s1 = inlined_call_operand.vmem [shape: f32[16,128], index: 1, kind: input, shape index: {}]
  %s2 = inlined_call_operand.vmem [shape: f32[16,128], index: 2, kind: output, shape index: {}]
  %s3 = sld [smem:[#allocation0]]
  $region18: #{focal_loss_pallas.1} parent=0
    _
  %s5 = ssub.s32 1, %s3
  %s6 = scalar_select 0, %s5, %s3
  // Predicated region
  $region2: #{focal_loss_pallas.1} parent=0 // pred_check
    _
  $region3: #{focal_loss_pallas.1} parent=0 // pred_check_branch
    %8 = sbr.rel (0) target = $region5
  $region4: #{focal_loss_pallas.1} parent=0 // pred_region
    _
  $region5: #{focal_loss_pallas.1} parent=0 // pred_fallthru
    _
  // Predicated region
  $region6: #{focal_loss_pallas.1} parent=0 // pred_check
    _
  $region7: #{focal_loss_pallas.1} parent=0 // pred_check_branch
    %10 = sbr.rel (0) target = $region9
  $region8: #{focal_loss_pallas.1} parent=0 // pred_region
    _
  $region9: #{focal_loss_pallas.1} parent=0 // pred_fallthru
    _
  %v11 = vld [vmem:[%s0] sm:$0xff]
  %v12 = vld [vmem:[%s0 + $0x8] sm:$0xff]
  %v13 = vld [vmem:[%s1] sm:$0xff]
  %v14 = vld [vmem:[%s1 + $0x8] sm:$0xff]
  %v15 = vand.u32 2147483647, %v11
  %v16 = vand.u32 2147483647, %v12
  %v17 = vsub.f32 0.0, %v15
  %v18 = vsub.f32 0.0, %v16
  %v19 = vmul.f32 %v17, 1.442695
  %v20 = vpow.pop %v19
  %v21 = vmul.f32 %v18, 1.442695
  %v22 = vpow.pop %v21
  %v23 = vmax.f32 %v11, 0.0
  %v24 = vmax.f32 %v12, 0.0
  %v25 = vmul.f32 %v11, %v13
  %v26 = vmul.f32 %v12, %v14
  %v27 = vsub.f32 %v23, %v25
  %v28 = vsub.f32 %v24, %v26
  %v29 = vadd.f32 %v20, 1.0
  %v30 = vlog2.pop %v29
  %v31 = vmul.f32 %v30, 0.6931472
  %v32 = vmul.f32 -0.5, %v20
  %v33 = vadd.f32 %v32, 1.0
  %v34 = vmul.f32 %v33, %v20
  %v35 = vand.u32 2147483647, %v20
  %vm36 = vcmp.lt.f32.partialorder %v35, 0.0004427343
  %v37 = vsel %vm36, %v34, %v31
  %v38 = vadd.f32 %v22, 1.0
  %v39 = vlog2.pop %v38
  %v40 = vmul.f32 %v39, 0.6931472
  %v41 = vmul.f32 -0.5, %v22
  %v42 = vadd.f32 %v41, 1.0
  %v43 = vmul.f32 %v42, %v22
  %v44 = vand.u32 2147483647, %v22
  %vm45 = vcmp.lt.f32.partialorder %v44, 0.0004427343
  %v46 = vsel %vm45, %v43, %v40
  %v47 = vadd.f32 %v27, %v37
  %v48 = vadd.f32 %v28, %v46
  %vm49 = vcmp.ge.f32.partialorder %v11, 0.0
  %vm50 = vcmp.ge.f32.partialorder %v12, 0.0
  %v51 = vsel %vm49, %v20, 1.0
  %v52 = vsel %vm50, %v22, 1.0
  %v53 = vadd.f32 %v20, 1.0
  %v54 = vadd.f32 %v22, 1.0
  %v55 = vrcp.pop %v53
  %v56 = vmul.f32 %v51, %v55
  %v57 = vrcp.pop %v54
  %v58 = vmul.f32 %v52, %v57
  %vm59 = vcmp.eq.f32.partialorder %v13, 1.0
  %vm60 = vcmp.eq.f32.partialorder %v14, 1.0
  %v61 = vsel %vm59, 0.8, 0.2
  %v62 = vsel %vm60, 0.8, 0.2
  %v63 = vmul.f32 %v56, %v56
  %v64 = vmul.f32 %v58, %v58
  %v65 = vmul.f32 %v61, %v63
  %v66 = vmul.f32 %v62, %v64
  %v67 = vmul.f32 %v65, %v47
  %v68 = vmul.f32 %v66, %v48
  %v69 = vadd.f32 %v47, %v48
  %70 = vadd.xlane.f32.xlu0 %v69
  %v71 = vpop.xlane.xlu0 %70
  %v72 = vrot.slane %v71, 4
  %v73 = vadd.f32 %v71, %v72
  %v74 = vrot.slane %v73, 2
  %v75 = vadd.f32 %v73, %v74
  %v76 = vrot.slane %v75, 1
  %v77 = vadd.f32 %v75, %v76
  %s78 = vtos %v77
  %v79 = vadd.f32 %v67, %v68
  %80 = vadd.xlane.f32.xlu0 %v79
  %v81 = vpop.xlane.xlu0 %80
  %v82 = vrot.slane %v81, 4
  %v83 = vadd.f32 %v81, %v82
  %v84 = vrot.slane %v83, 2
  %v85 = vadd.f32 %v83, %v84
  %v86 = vrot.slane %v85, 1
  %v87 = vadd.f32 %v85, %v86
  %s88 = vtos %v87
  %v89 = vstv %s88
  %v90 = vrcp.pop %v89
  %s91 = vtos %v90
  %s92 = smul.f32 %s78, %s91
  %v93 = vstv %s92
  %v94 = vmul.f32 %v67, %v93
  %v95 = vmul.f32 %v68, %v93
  %96 = vst [vmem:[%s2] sm:$0xff] %v94
  %97 = vst [vmem:[%s2 + $0x8] sm:$0xff] %v95
  // Predicated region
  $region10: #{focal_loss_pallas.1} parent=0 // pred_check
    _
  $region11: #{focal_loss_pallas.1} parent=0 // pred_check_branch
    %99 = sbr.rel (0) target = $region13
  $region12: #{focal_loss_pallas.1} parent=0 // pred_region
    _
  $region13: #{focal_loss_pallas.1} parent=0 // pred_fallthru
    _
  // Predicated region
  $region14: #{focal_loss_pallas.1} parent=0 // pred_check
    _
  $region15: #{focal_loss_pallas.1} parent=0 // pred_check_branch
    %101 = sbr.rel (0) target = $region17
  $region16: #{focal_loss_pallas.1} parent=0 // pred_region
    _
  $region17: #{focal_loss_pallas.1} parent=0 // pred_fallthru
    _

</llo_original>
